<compile_context>
chip_gen: v7x
topology: tpu7x:2x2x1
jax: 0.10.0
libtpu: 0.0.40
codegen_flags: <defaults>
</compile_context>

<pallas_src>
import jax
import jax.numpy as jnp
from jax.experimental import pallas as pl
from jax.experimental.pallas import tpu as pltpu

LATENT = 100        # module input size
HIDDEN = 200        # module hidden size
HIDDEN_PAD = 256    # lane-aligned hidden width (zero padding is exact)


def generator_kernel(x_ref, w1_ref, b1_ref, w2_ref, b2_ref, w3_ref, b3_ref, o_ref):
    # x tile: [b_tile, 100] f32 streamed straight from HBM; cast fused here.
    x = x_ref[...].astype(jnp.bfloat16)

    # fc1 + ReLU (bf16 MXU inputs, f32 accumulate, f32 elementwise)
    h1 = jnp.dot(x, w1_ref[...], preferred_element_type=jnp.float32) + b1_ref[...]
    h1 = jnp.maximum(h1, 0.0)

    # fc2 + ReLU
    h2 = jnp.dot(h1.astype(jnp.bfloat16), w2_ref[...],
                 preferred_element_type=jnp.float32) + b2_ref[...]
    h2 = jnp.maximum(h2, 0.0)

    # fc3 + tanh + rescale to [0, 1]
    h3 = jnp.dot(h2.astype(jnp.bfloat16), w3_ref[...],
                 preferred_element_type=jnp.float32) + b3_ref[...]
    o_ref[...] = ((jnp.tanh(h3) + 1.0) * 0.5).astype(o_ref.dtype)


def prepare_generator_params(params):
    """One-time pad + cast of the weight set (hoisted out of the per-call path).

    Hidden dim is zero-padded 200 -> 256 (exact: padded columns/rows contribute
    0 to every dot product).  Weights bf16, biases f32.  Output dim is NOT
    padded so the kernel writes the final layout directly.
    """
    w1, b1, w2, b2, w3, b3 = params
    dim = w3.shape[1]

    def padc(a, rows, cols, dtype):
        return jnp.pad(a, ((0, rows - a.shape[0]), (0, cols - a.shape[1]))).astype(dtype)

    bf, f32 = jnp.bfloat16, jnp.float32
    return (padc(w1, LATENT, HIDDEN_PAD, bf),
            padc(b1, 1, HIDDEN_PAD, f32),
            padc(w2, HIDDEN_PAD, HIDDEN_PAD, bf),
            padc(b2, 1, HIDDEN_PAD, f32),
            padc(w3, HIDDEN_PAD, dim, bf),
            padc(b3, 1, dim, f32))


def generator_forward(x, prepared_params, *, b_tile=None, out_dtype=jnp.float32):
    """x: [B, 100] float32 -> [B, dim] out_dtype (dim taken from prepared w3)."""
    w1p, b1p, w2p, b2p, w3p, b3p = prepared_params
    B = x.shape[0]
    dim = w3p.shape[1]

    if b_tile is None:
        if B <= 512:
            # Single grid step covering the whole batch; block dim == full array
            # dim, so any B (even non-multiples of 8) is legal.
            b_tile = B
        else:
            # 256-row-aligned tiles, capped at 2048 rows, and sized so the grid
            # keeps >=2 steps (v7x megacore sharding + pipeline depth).
            b_tile = min(2048, max(256, ((pl.cdiv(B, 2) + 255) // 256) * 256))
    grid = (pl.cdiv(B, b_tile),)

    def pinned(shape):
        # weights / biases: same block every grid step -> stay VMEM-resident
        return pl.BlockSpec(shape, lambda i: (0,) * len(shape))

    return pl.pallas_call(
        generator_kernel,
        out_shape=jax.ShapeDtypeStruct((B, dim), out_dtype),
        grid_spec=pltpu.PrefetchScalarGridSpec(
            num_scalar_prefetch=0,
            grid=grid,
            in_specs=[
                pl.BlockSpec((b_tile, LATENT), lambda i: (i, 0)),  # last dim == full dim
                pinned(w1p.shape),
                pinned(b1p.shape),
                pinned(w2p.shape),
                pinned(b2p.shape),
                pinned(w3p.shape),
                pinned(b3p.shape),
            ],
            out_specs=pl.BlockSpec((b_tile, dim), lambda i: (i, 0)),  # final layout
        ),
        compiler_params=pltpu.CompilerParams(
            dimension_semantics=("parallel",),  # batch tiles shared across TCs on v7x
        ),
    )(x, w1p, b1p, w2p, b2p, w3p, b3p)


def init_generator_params(key, dim):
    """Deterministic synthetic init matching the PyTorch module's shapes.

    PyTorch Linear(in, out) has weight [out, in]; we store the transpose
    [in, out]. Biases kept 2-D [1, out] for clean TPU layout/broadcast.
    """
    k1, k2, k3, k4, k5, k6 = jax.random.split(key, 6)

    def uniform_like(k, shape, fan_in):
        bound = 1.0 / jnp.sqrt(jnp.float32(fan_in))
        return jax.random.uniform(k, shape, jnp.float32, -bound, bound)

    w1 = uniform_like(k1, (LATENT, HIDDEN), LATENT)
    b1 = uniform_like(k2, (1, HIDDEN), LATENT)
    w2 = uniform_like(k3, (HIDDEN, HIDDEN), HIDDEN)
    b2 = uniform_like(k4, (1, HIDDEN), HIDDEN)
    w3 = uniform_like(k5, (HIDDEN, dim), HIDDEN)
    b3 = uniform_like(k6, (1, dim), HIDDEN)
    return (w1, b1, w2, b2, w3, b3)


def generator_reference_f32(x, params):
    """Pure-JAX f32 reference (module semantics)."""
    w1, b1, w2, b2, w3, b3 = params
    h = jax.nn.relu(x @ w1 + b1)
    h = jax.nn.relu(h @ w2 + b2)
    h = h @ w3 + b3
    return (jnp.tanh(h) + 1.0) / 2.0


def generator_reference_bf16(x, params):
    """Pure-JAX reference with the same bf16 dot inputs / f32 accumulation as the kernel."""
    w1, b1, w2, b2, w3, b3 = params
    bf = jnp.bfloat16
    h = jnp.dot(x.astype(bf), w1.astype(bf), preferred_element_type=jnp.float32) + b1
    h = jnp.maximum(h, 0.0)
    h = jnp.dot(h.astype(bf), w2.astype(bf), preferred_element_type=jnp.float32) + b2
    h = jnp.maximum(h, 0.0)
    h = jnp.dot(h.astype(bf), w3.astype(bf), preferred_element_type=jnp.float32) + b3
    return (jnp.tanh(h) + 1.0) * 0.5


if __name__ == "__main__":
    key = jax.random.PRNGKey(0)
    k_param, k_x = jax.random.split(key)

    dim = 32          # Generator(dim=32)
    batch = 8
    params = init_generator_params(k_param, dim)
    prepared = prepare_generator_params(params)   # pad/cast once, reuse per call
    x = jax.random.normal(k_x, (batch, LATENT), jnp.float32)  # latent input of size 100

    out = generator_forward(x, prepared)
    out = jax.block_until_ready(out)

    assert out.shape == (batch, dim)
    # Tight check vs. a reference using identical bf16-operand / f32-accum math.
    ref_bf = generator_reference_bf16(x, params)
    assert jnp.allclose(out, ref_bf, atol=1e-3, rtol=1e-3), "mismatch vs. bf16-matched reference"
    # Looser check vs. the pure-f32 module semantics (bf16 quantization only).
    ref_f32 = generator_reference_f32(x, params)
    assert jnp.allclose(out, ref_f32, atol=3e-2, rtol=3e-2), "mismatch vs. f32 reference"
    assert jnp.all(out >= 0.0) and jnp.all(out <= 1.0)

    print("KERNEL_OK")
</pallas_src>

<mosaic_0001>
module attributes {stable_mosaic.version = 11 : i64} {
  func.func @generator_kernel(%arg0: i32, %arg1: memref<8x100xf32, #tpu.memory_space<vmem>>, %arg2: memref<100x256xbf16, #tpu.memory_space<vmem>>, %arg3: memref<1x256xf32, #tpu.memory_space<vmem>>, %arg4: memref<256x256xbf16, #tpu.memory_space<vmem>>, %arg5: memref<1x256xf32, #tpu.memory_space<vmem>>, %arg6: memref<256x32xbf16, #tpu.memory_space<vmem>>, %arg7: memref<1x32xf32, #tpu.memory_space<vmem>>, %arg8: memref<8x32xf32, #tpu.memory_space<vmem>>) attributes {dimension_semantics = [#tpu.dimension_semantics<parallel>], iteration_bounds = array<i64: 1>, scalar_prefetch = 0 : i64, scratch_operands = 0 : i64, tpu.core_type = #tpu.core_type<tc>, window_params = [{transform_indices = @transform_0, window_bounds = array<i64: 8, 100>}, {pipeline_mode = #tpu.pipeline_mode<synchronous>, transform_indices = @transform_1, window_bounds = array<i64: 100, 256>}, {pipeline_mode = #tpu.pipeline_mode<synchronous>, transform_indices = @transform_2, window_bounds = array<i64: 1, 256>}, {pipeline_mode = #tpu.pipeline_mode<synchronous>, transform_indices = @transform_3, window_bounds = array<i64: 256, 256>}, {pipeline_mode = #tpu.pipeline_mode<synchronous>, transform_indices = @transform_4, window_bounds = array<i64: 1, 256>}, {pipeline_mode = #tpu.pipeline_mode<synchronous>, transform_indices = @transform_5, window_bounds = array<i64: 256, 32>}, {pipeline_mode = #tpu.pipeline_mode<synchronous>, transform_indices = @transform_6, window_bounds = array<i64: 1, 32>}, {transform_indices = @transform_7, window_bounds = array<i64: 8, 32>}]} {
    %c0 = arith.constant 0 : index
    %c0_0 = arith.constant 0 : index
    %0 = vector.load %arg1[%c0, %c0_0] : memref<8x100xf32, #tpu.memory_space<vmem>>, vector<8x100xf32>
    %1 = arith.truncf %0 : vector<8x100xf32> to vector<8x100xbf16>
    %c0_1 = arith.constant 0 : index
    %c0_2 = arith.constant 0 : index
    %2 = vector.load %arg2[%c0_1, %c0_2] : memref<100x256xbf16, #tpu.memory_space<vmem>>, vector<100x256xbf16>
    %cst = arith.constant dense<0.000000e+00> : vector<8x256xf32>
    %3 = tpu.matmul %1, %2, %cst {dimension_numbers = #tpu.dot_dimension_numbers<[1], [0], [0], [1], [0, 0, 1, 1], [], []>} : vector<8x100xbf16>, vector<100x256xbf16>, vector<8x256xf32> -> vector<8x256xf32>
    %c0_3 = arith.constant 0 : index
    %c0_4 = arith.constant 0 : index
    %4 = vector.load %arg3[%c0_3, %c0_4] : memref<1x256xf32, #tpu.memory_space<vmem>>, vector<1x256xf32>
    %5 = vector.broadcast %4 : vector<1x256xf32> to vector<8x256xf32>
    %6 = arith.addf %3, %5 : vector<8x256xf32>
    %cst_5 = arith.constant 0.000000e+00 : f32
    %7 = vector.broadcast %cst_5 : f32 to vector<8x256xf32>
    %8 = arith.maximumf %6, %7 : vector<8x256xf32>
    %9 = arith.truncf %8 : vector<8x256xf32> to vector<8x256xbf16>
    %c0_6 = arith.constant 0 : index
    %c0_7 = arith.constant 0 : index
    %10 = vector.load %arg4[%c0_6, %c0_7] : memref<256x256xbf16, #tpu.memory_space<vmem>>, vector<256x256xbf16>
    %cst_8 = arith.constant dense<0.000000e+00> : vector<8x256xf32>
    %11 = tpu.matmul %9, %10, %cst_8 {dimension_numbers = #tpu.dot_dimension_numbers<[1], [0], [0], [1], [0, 0, 1, 1], [], []>} : vector<8x256xbf16>, vector<256x256xbf16>, vector<8x256xf32> -> vector<8x256xf32>
    %c0_9 = arith.constant 0 : index
    %c0_10 = arith.constant 0 : index
    %12 = vector.load %arg5[%c0_9, %c0_10] : memref<1x256xf32, #tpu.memory_space<vmem>>, vector<1x256xf32>
    %13 = vector.broadcast %12 : vector<1x256xf32> to vector<8x256xf32>
    %14 = arith.addf %11, %13 : vector<8x256xf32>
    %cst_11 = arith.constant 0.000000e+00 : f32
    %15 = vector.broadcast %cst_11 : f32 to vector<8x256xf32>
    %16 = arith.maximumf %14, %15 : vector<8x256xf32>
    %17 = arith.truncf %16 : vector<8x256xf32> to vector<8x256xbf16>
    %c0_12 = arith.constant 0 : index
    %c0_13 = arith.constant 0 : index
    %18 = vector.load %arg6[%c0_12, %c0_13] : memref<256x32xbf16, #tpu.memory_space<vmem>>, vector<256x32xbf16>
    %cst_14 = arith.constant dense<0.000000e+00> : vector<8x32xf32>
    %19 = tpu.matmul %17, %18, %cst_14 {dimension_numbers = #tpu.dot_dimension_numbers<[1], [0], [0], [1], [0, 0, 1, 1], [], []>} : vector<8x256xbf16>, vector<256x32xbf16>, vector<8x32xf32> -> vector<8x32xf32>
    %c0_15 = arith.constant 0 : index
    %c0_16 = arith.constant 0 : index
    %20 = vector.load %arg7[%c0_15, %c0_16] : memref<1x32xf32, #tpu.memory_space<vmem>>, vector<1x32xf32>
    %21 = vector.broadcast %20 : vector<1x32xf32> to vector<8x32xf32>
    %22 = arith.addf %19, %21 : vector<8x32xf32>
    %23 = math.tanh %22 : vector<8x32xf32>
    %cst_17 = arith.constant 1.000000e+00 : f32
    %24 = vector.broadcast %cst_17 : f32 to vector<8x32xf32>
    %25 = arith.addf %23, %24 : vector<8x32xf32>
    %cst_18 = arith.constant 5.000000e-01 : f32
    %26 = vector.broadcast %cst_18 : f32 to vector<8x32xf32>
    %27 = arith.mulf %25, %26 : vector<8x32xf32>
    %c0_19 = arith.constant 0 : index
    %c0_20 = arith.constant 0 : index
    %28 = vector.load %arg8[%c0_19, %c0_20] : memref<8x32xf32, #tpu.memory_space<vmem>>, vector<8x32xf32>
    tpu.vector_store %arg8[%c0_19, %c0_20], %27 {strides = array<i32>} : memref<8x32xf32, #tpu.memory_space<vmem>>, vector<8x32xf32>,
    return
  }
  func.func @transform_0(%arg0: i32) -> (i32, i32) {
    %c0_i32 = arith.constant 0 : i32
    %c0_i32_0 = arith.constant 0 : i32
    return %arg0, %c0_i32 : i32, i32
  }
  func.func @transform_1(%arg0: i32) -> (i32, i32) {
    %c0_i32 = arith.constant 0 : i32
    %c0_i32_0 = arith.constant 0 : i32
    %c0_i32_1 = arith.constant 0 : i32
    return %c0_i32, %c0_i32_0 : i32, i32
  }
  func.func @transform_2(%arg0: i32) -> (i32, i32) {
    %c0_i32 = arith.constant 0 : i32
    %c0_i32_0 = arith.constant 0 : i32
    %c0_i32_1 = arith.constant 0 : i32
    return %c0_i32, %c0_i32_0 : i32, i32
  }
  func.func @transform_3(%arg0: i32) -> (i32, i32) {
    %c0_i32 = arith.constant 0 : i32
    %c0_i32_0 = arith.constant 0 : i32
    %c0_i32_1 = arith.constant 0 : i32
    return %c0_i32, %c0_i32_0 : i32, i32
  }
  func.func @transform_4(%arg0: i32) -> (i32, i32) {
    %c0_i32 = arith.constant 0 : i32
    %c0_i32_0 = arith.constant 0 : i32
    %c0_i32_1 = arith.constant 0 : i32
    return %c0_i32, %c0_i32_0 : i32, i32
  }
  func.func @transform_5(%arg0: i32) -> (i32, i32) {
    %c0_i32 = arith.constant 0 : i32
    %c0_i32_0 = arith.constant 0 : i32
    %c0_i32_1 = arith.constant 0 : i32
    return %c0_i32, %c0_i32_0 : i32, i32
  }
  func.func @transform_6(%arg0: i32) -> (i32, i32) {
    %c0_i32 = arith.constant 0 : i32
    %c0_i32_0 = arith.constant 0 : i32
    %c0_i32_1 = arith.constant 0 : i32
    return %c0_i32, %c0_i32_0 : i32, i32
  }
  func.func @transform_7(%arg0: i32) -> (i32, i32) {
    %c0_i32 = arith.constant 0 : i32
    %c0_i32_0 = arith.constant 0 : i32
    return %arg0, %c0_i32 : i32, i32
  }
}

</mosaic_0001>

<llo_original>
// kernel: tpu_custom_call.1
$region0: #{tpu_custom_call.1}
  #allocation0 [shape = 'u32[]', space=smem, size = 0x4, offset = 0x4, fixed_abs, tag = 'smem constant byte address 0x4 - core index']
  #allocation1 [shape = 'u32[144,128]{1,0:T(1,128)}', space=vmem, size = 0x12000, scoped, tag = 'internal scratch']
  %s0 = inlined_call_operand.vmem [shape: f32[8,100], index: 0, kind: input, shape index: {}]
  %s1 = inlined_call_operand.vmem [shape: bf16[100,256], index: 1, kind: input, shape index: {}]
  %s2 = inlined_call_operand.vmem [shape: f32[1,256], index: 2, kind: input, shape index: {}]
  %s3 = inlined_call_operand.hbm [shape: bf16[256,256], index: 3, kind: input, shape index: {}]
  %s4 = inlined_call_operand.vmem [shape: f32[1,256], index: 4, kind: input, shape index: {}]
  %s5 = inlined_call_operand.vmem [shape: bf16[256,32], index: 5, kind: input, shape index: {}]
  %s6 = inlined_call_operand.vmem [shape: f32[1,32], index: 6, kind: input, shape index: {}]
  %s7 = inlined_call_operand.hbm [shape: f32[8,32], index: 7, kind: output, shape index: {}]
  %s8 = sld [smem:[#allocation0]]
  $region42: #{tpu_custom_call.1} parent=0
    _
  %s10 = ssub.s32 1, %s8
  %s11 = scalar_select 0, %s10, %s8
  $region1: #{tpu_custom_call.1} parent=0
    #allocation2 [shape = 'u8[131072]{0}', space=vmem, size = 0x20000, scoped, tag = 'input window, operand 3, single buffered']
    #allocation3 [shape = 's32[1]{0}', space=sflag, size = 0x4, scoped, tag = 'scoped memory for tpu_custom_call.1']
    #allocation4 [shape = 's32[1]{0}', space=sflag, size = 0x4, scoped, tag = 'scoped memory for tpu_custom_call.1']
    #allocation5 [shape = 'u8[4096]{0}', space=vmem, size = 0x1000, scoped, tag = 'output window, operand 0, single buffered']
    %12 = vsyncpa [#allocation3], 0
    %13 = vsyncpa [#allocation4], 0
    // Predicated region
    $region2: #{tpu_custom_call.1} parent=1 // pred_check
      _
    $region3: #{tpu_custom_call.1} parent=1 // pred_check_branch
      %15 = sbr.rel (0) target = $region5
    $region4: #{tpu_custom_call.1} parent=1 // pred_region
      _
    $region5: #{tpu_custom_call.1} parent=1 // pred_fallthru
      _
    // Predicated region
    $region6: #{tpu_custom_call.1} parent=1 // pred_check
      _
    $region7: #{tpu_custom_call.1} parent=1 // pred_check_branch
      %17 = sbr.rel (0) target = $region9
    $region8: #{tpu_custom_call.1} parent=1 // pred_region
      _
    $region9: #{tpu_custom_call.1} parent=1 // pred_fallthru
      _
    // Predicated region
    $region10: #{tpu_custom_call.1} parent=1 // pred_check
      _
    $region11: #{tpu_custom_call.1} parent=1 // pred_check_branch
      %19 = sbr.rel (0) target = $region13
    $region12: #{tpu_custom_call.1} parent=1 // pred_region
      _
    $region13: #{tpu_custom_call.1} parent=1 // pred_fallthru
      _
    // Predicated region
    $region14: #{tpu_custom_call.1} parent=1 // pred_check
      _
    $region15: #{tpu_custom_call.1} parent=1 // pred_check_branch
      %21 = sbr.rel (0) target = $region17
    $region16: #{tpu_custom_call.1} parent=1 // pred_region
      %s23 = ssub.s32 4096, 4096
      %24 = vsyncadd [#allocation3], %s23
      %s25 = sshll.u32 [#allocation2], 4
      %s26 = int_to_ptr.vmem [resolvable:$true] %s25
      %31 = dma.hbm_to_vmem [thread:$0]  %s3, 4096, %s26, [#allocation3], 128, 128, 8
    $region17: #{tpu_custom_call.1} parent=1 // pred_fallthru
      _
    // Predicated region
    $region18: #{tpu_custom_call.1} parent=1 // pred_check
      _
    $region19: #{tpu_custom_call.1} parent=1 // pred_check_branch
      %33 = sbr.rel (0) target = $region21
    $region20: #{tpu_custom_call.1} parent=1 // pred_region
      _
    $region21: #{tpu_custom_call.1} parent=1 // pred_fallthru
      _
    // Predicated region
    $region22: #{tpu_custom_call.1} parent=1 // pred_check
      _
    $region23: #{tpu_custom_call.1} parent=1 // pred_check_branch
      %35 = sbr.rel (0) target = $region25
    $region24: #{tpu_custom_call.1} parent=1 // pred_region
      _
    $region25: #{tpu_custom_call.1} parent=1 // pred_fallthru
      _
    // Predicated region
    $region26: #{tpu_custom_call.1} parent=1 // pred_check
      _
    $region27: #{tpu_custom_call.1} parent=1 // pred_check_branch
      %37 = sbr.rel (0) target = $region29
    $region28: #{tpu_custom_call.1} parent=1 // pred_region
      _
    $region29: #{tpu_custom_call.1} parent=1 // pred_fallthru
      _
    // Predicated region
    $region30: #{tpu_custom_call.1} parent=1 // pred_check
      _
    $region31: #{tpu_custom_call.1} parent=1 // pred_check_branch
      %39 = sbr.rel (0) target = $region33
    $region32: #{tpu_custom_call.1} parent=1 // pred_region
      %40 = dma.done [#allocation3], 4096
    $region33: #{tpu_custom_call.1} parent=1 // pred_fallthru
      _
    %v42 = vld [vmem:[%s0] sm:$0xff]
    %v43 = vpack.c.bf16 %v42, %v42
    %v44 = vld [vmem:[%s1] sm:$0xff]
    %v45 = vld [vmem:[%s1 + $0x8] sm:$0xff]
    %v46 = vld [vmem:[%s1 + $0x10] sm:$0xff]
    %v47 = vld [vmem:[%s1 + $0x18] sm:$0xff]
    %v48 = vld [vmem:[%s1 + $0x20] sm:$0xff]
    %v49 = vld [vmem:[%s1 + $0x28] sm:$0xff]
    %v50 = vld [vmem:[%s1 + $0x30] sm:$0xff]
    %v51 = vld [vmem:[%s1 + $0x38] sm:$0xff]
    %v52 = vld [vmem:[%s1 + $0x40] sm:$0xff]
    %v53 = vld [vmem:[%s1 + $0x48] sm:$0xff]
    %v54 = vld [vmem:[%s1 + $0x50] sm:$0xff]
    %v55 = vld [vmem:[%s1 + $0x58] sm:$0xff]
    %v56 = vld [vmem:[%s1 + $0x60] sm:$0x33]
    %v57 = vld [vmem:[%s2] sm:$0x3]
    %v59 = vlaneseq
    %v60 = vshrl.u32 %v59, 7
    %v61 = vsub.s32 0, %v60
    %v62 = vrot.slane %v57, %v61
    %v63 = vlaneseq
    %v64 = vshrl.u32 %v63, 7
    %v65 = vsub.s32 1, %v64
    %v66 = vrot.slane %v57, %v65
    %v82 = vunpack.c.l.b16 %v44
    %v83 = vunpack.c.h.b16 %v44
    %v84 = vunpack.c.l.b16 %v45
    %v85 = vunpack.c.h.b16 %v45
    %v86 = vunpack.c.l.b16 %v46
    %v87 = vunpack.c.h.b16 %v46
    %v88 = vunpack.c.l.b16 %v47
    %v89 = vunpack.c.h.b16 %v47
    %v90 = vunpack.c.l.b16 %v48
    %v91 = vunpack.c.h.b16 %v48
    %v92 = vunpack.c.l.b16 %v49
    %v93 = vunpack.c.h.b16 %v49
    %v94 = vunpack.c.l.b16 %v50
    %v95 = vunpack.c.h.b16 %v50
    %v96 = vunpack.c.l.b16 %v51
    %v97 = vunpack.c.h.b16 %v51
    %v98 = vunpack.c.l.b16 %v52
    %v99 = vunpack.c.h.b16 %v52
    %v100 = vunpack.c.l.b16 %v53
    %v101 = vunpack.c.h.b16 %v53
    %v102 = vunpack.c.l.b16 %v54
    %v103 = vunpack.c.h.b16 %v54
    %v104 = vunpack.c.l.b16 %v55
    %v105 = vunpack.c.h.b16 %v55
    %v106 = vunpack.c.l.b16 %v56
    %v107 = vunpack.c.h.b16 %v56
    %v108 = vpack.c.b16 %v84, %v82
    %v109 = vpack.c.b16 %v85, %v83
    %v110 = vpack.c.b16 %v88, %v86
    %v111 = vpack.c.b16 %v89, %v87
    %v112 = vpack.c.b16 %v92, %v90
    %v113 = vpack.c.b16 %v93, %v91
    %v114 = vpack.c.b16 %v96, %v94
    %v115 = vpack.c.b16 %v97, %v95
    %v116 = vpack.c.b16 %v100, %v98
    %v117 = vpack.c.b16 %v101, %v99
    %v118 = vpack.c.b16 %v104, %v102
    %v119 = vpack.c.b16 %v105, %v103
    %v120 = vpack.c.b16 %v106, %v106
    %v121 = vpack.c.b16 %v107, %v107
    %vm134 = vcmask 818176
    %v136 = vsel %vm134, %v43, 0
    %vm138 = vcmask 1041408
    %v140 = vsel %vm138, %v120, 0
    %v143 = vsel %vm138, %v121, 0
    %145 = vmatprep.subr.bf16.mxu0 %v109
    %146 = vmatpush1.bf16.msra.mxu0 %v108
    %147 = vmatprep.subr.bf16.mxu0 %v111
    %148 = vmatpush1.bf16.msra.mxu0 %v110
    %149 = vmatprep.subr.bf16.mxu0 %v113
    %150 = vmatpush1.bf16.msra.mxu0 %v112
    %151 = vmatprep.subr.bf16.mxu0 %v115
    %152 = vmatpush1.bf16.msra.mxu0 %v114
    %153 = vmatprep.subr.bf16.mxu0 %v117
    %154 = vmatpush1.bf16.msra.mxu0 %v116
    %155 = vmatprep.subr.bf16.mxu0 %v119
    %156 = vmatpush1.bf16.msra.mxu0 %v118
    %157 = vmatprep.subr.bf16.mxu0 %v143
    %158 = vmatpush1.bf16.msra.mxu0 %v140
    %159 = vmatprep.subr.bf16.mxu0 0
    %160 = vmatpush1.bf16.msra.mxu0 0
    %161 = vmatprep.subr.bf16.mxu0 0
    %162 = vmatpush1.bf16.msra.mxu0 0
    %163 = vmatprep.subr.bf16.mxu0 0
    %164 = vmatpush1.bf16.msra.mxu0 0
    %165 = vmatprep.subr.bf16.mxu0 0
    %166 = vmatpush1.bf16.msra.mxu0 0
    %167 = vmatprep.subr.bf16.mxu0 0
    %168 = vmatpush1.bf16.msra.mxu0 0
    %169 = vmatprep.subr.bf16.mxu0 0
    %170 = vmatpush1.bf16.msra.mxu0 0
    %171 = vmatprep.subr.bf16.mxu0 0
    %172 = vmatpush1.bf16.msra.mxu0 0
    %173 = vmatprep.subr.bf16.mxu0 0
    %174 = vmatpush1.bf16.msra.mxu0 0
    %175 = vmatprep.subr.bf16.mxu0 0
    %176 = vmatpush1.bf16.msra.mxu0 0
    %177 = vmatprep.mubr.bf16.mxu0 0
    %178 = vmatmul.mubr.bf16.gmra.mrb[0].mxu0 %v136
    %v179 = vpop.f32.mrb[0].mxu0
    %v180 = vadd.f32 %v62, %v179
    %v181 = vpop.f32.mrb[0].mxu0
    %v182 = vadd.f32 %v66, %v181
    %v183 = vpop.f32.mrb[0].mxu0
    %v184 = vpop.f32.mrb[0].mxu0
    %185 = vdwg.mxu0
    %v186 = vmax.f32 %v180, 0.0
    %v187 = vmax.f32 %v182, 0.0
    %v188 = vpack.c.bf16 %v186, %v186
    %v189 = vpack.c.bf16 %v187, %v187
    %v190 = vld [vmem:[#allocation2] sm:$0xff]
    %v191 = vld [vmem:[#allocation2 + $0x8] sm:$0xff]
    %v192 = vld [vmem:[#allocation2 + $0x10] sm:$0xff]
    %v193 = vld [vmem:[#allocation2 + $0x18] sm:$0xff]
    %v194 = vld [vmem:[#allocation2 + $0x20] sm:$0xff]
    %v195 = vld [vmem:[#allocation2 + $0x28] sm:$0xff]
    %v196 = vld [vmem:[#allocation2 + $0x30] sm:$0xff]
    %v197 = vld [vmem:[#allocation2 + $0x38] sm:$0xff]
    %v198 = vld [vmem:[#allocation2 + $0x40] sm:$0xff]
    %v199 = vld [vmem:[#allocation2 + $0x48] sm:$0xff]
    %v200 = vld [vmem:[#allocation2 + $0x50] sm:$0xff]
    %v201 = vld [vmem:[#allocation2 + $0x58] sm:$0xff]
    %v202 = vld [vmem:[#allocation2 + $0x60] sm:$0xff]
    %v203 = vld [vmem:[#allocation2 + $0x68] sm:$0xff]
    %v204 = vld [vmem:[#allocation2 + $0x70] sm:$0xff]
    %v205 = vld [vmem:[#allocation2 + $0x78] sm:$0xff]
    %v206 = vld [vmem:[#allocation2 + $0x80] sm:$0xff]
    %v207 = vld [vmem:[#allocation2 + $0x88] sm:$0xff]
    %v208 = vld [vmem:[#allocation2 + $0x90] sm:$0xff]
    %v209 = vld [vmem:[#allocation2 + $0x98] sm:$0xff]
    %v210 = vld [vmem:[#allocation2 + $0xa0] sm:$0xff]
    %v211 = vld [vmem:[#allocation2 + $0xa8] sm:$0xff]
    %v212 = vld [vmem:[#allocation2 + $0xb0] sm:$0xff]
    %v213 = vld [vmem:[#allocation2 + $0xb8] sm:$0xff]
    %v214 = vld [vmem:[#allocation2 + $0xc0] sm:$0xff]
    %v215 = vld [vmem:[#allocation2 + $0xc8] sm:$0xff]
    %v216 = vld [vmem:[#allocation2 + $0xd0] sm:$0xff]
    %v217 = vld [vmem:[#allocation2 + $0xd8] sm:$0xff]
    %v218 = vld [vmem:[#allocation2 + $0xe0] sm:$0xff]
    %v219 = vld [vmem:[#allocation2 + $0xe8] sm:$0xff]
    %v220 = vld [vmem:[#allocation2 + $0xf0] sm:$0xff]
    %v221 = vld [vmem:[#allocation2 + $0xf8] sm:$0xff]
    %v222 = vld [vmem:[%s4] sm:$0x3]
    %v224 = vlaneseq
    %v225 = vshrl.u32 %v224, 7
    %v226 = vsub.s32 0, %v225
    %v227 = vrot.slane %v222, %v226
    %v228 = vlaneseq
    %v229 = vshrl.u32 %v228, 7
    %v230 = vsub.s32 1, %v229
    %v231 = vrot.slane %v222, %v230
    %v266 = vunpack.c.l.b16 %v190
    %v267 = vunpack.c.h.b16 %v190
    %v268 = vunpack.c.l.b16 %v191
    %v269 = vunpack.c.h.b16 %v191
    %v270 = vunpack.c.l.b16 %v192
    %v271 = vunpack.c.h.b16 %v192
    %v272 = vunpack.c.l.b16 %v193
    %v273 = vunpack.c.h.b16 %v193
    %v274 = vunpack.c.l.b16 %v194
    %v275 = vunpack.c.h.b16 %v194
    %v276 = vunpack.c.l.b16 %v195
    %v277 = vunpack.c.h.b16 %v195
    %v278 = vunpack.c.l.b16 %v196
    %v279 = vunpack.c.h.b16 %v196
    %v280 = vunpack.c.l.b16 %v197
    %v281 = vunpack.c.h.b16 %v197
    %v282 = vunpack.c.l.b16 %v198
    %v283 = vunpack.c.h.b16 %v198
    %v284 = vunpack.c.l.b16 %v199
    %v285 = vunpack.c.h.b16 %v199
    %v286 = vunpack.c.l.b16 %v200
    %v287 = vunpack.c.h.b16 %v200
    %v288 = vunpack.c.l.b16 %v201
    %v289 = vunpack.c.h.b16 %v201
    %v290 = vunpack.c.l.b16 %v202
    %v291 = vunpack.c.h.b16 %v202
    %v292 = vunpack.c.l.b16 %v203
    %v293 = vunpack.c.h.b16 %v203
    %v294 = vunpack.c.l.b16 %v204
    %v295 = vunpack.c.h.b16 %v204
    %v296 = vunpack.c.l.b16 %v205
    %v297 = vunpack.c.h.b16 %v205
    %v298 = vunpack.c.l.b16 %v206
    %v299 = vunpack.c.h.b16 %v206
    %v300 = vunpack.c.l.b16 %v207
    %v301 = vunpack.c.h.b16 %v207
    %v302 = vunpack.c.l.b16 %v208
    %v303 = vunpack.c.h.b16 %v208
    %v304 = vunpack.c.l.b16 %v209
    %v305 = vunpack.c.h.b16 %v209
    %v306 = vunpack.c.l.b16 %v210
    %v307 = vunpack.c.h.b16 %v210
    %v308 = vunpack.c.l.b16 %v211
    %v309 = vunpack.c.h.b16 %v211
    %v310 = vunpack.c.l.b16 %v212
    %v311 = vunpack.c.h.b16 %v212
    %v312 = vunpack.c.l.b16 %v213
    %v313 = vunpack.c.h.b16 %v213
    %v314 = vunpack.c.l.b16 %v214
    %v315 = vunpack.c.h.b16 %v214
    %v316 = vunpack.c.l.b16 %v215
    %v317 = vunpack.c.h.b16 %v215
    %v318 = vunpack.c.l.b16 %v216
    %v319 = vunpack.c.h.b16 %v216
    %v320 = vunpack.c.l.b16 %v217
    %v321 = vunpack.c.h.b16 %v217
    %v322 = vunpack.c.l.b16 %v218
    %v323 = vunpack.c.h.b16 %v218
    %v324 = vunpack.c.l.b16 %v219
    %v325 = vunpack.c.h.b16 %v219
    %v326 = vunpack.c.l.b16 %v220
    %v327 = vunpack.c.h.b16 %v220
    %v328 = vunpack.c.l.b16 %v221
    %v329 = vunpack.c.h.b16 %v221
    %v330 = vpack.c.b16 %v268, %v266
    %v331 = vpack.c.b16 %v269, %v267
    %v332 = vpack.c.b16 %v272, %v270
    %v333 = vpack.c.b16 %v273, %v271
    %v334 = vpack.c.b16 %v276, %v274
    %v335 = vpack.c.b16 %v277, %v275
    %v336 = vpack.c.b16 %v280, %v278
    %v337 = vpack.c.b16 %v281, %v279
    %v338 = vpack.c.b16 %v284, %v282
    %v339 = vpack.c.b16 %v285, %v283
    %v340 = vpack.c.b16 %v288, %v286
    %v341 = vpack.c.b16 %v289, %v287
    %v342 = vpack.c.b16 %v292, %v290
    %v343 = vpack.c.b16 %v293, %v291
    %v344 = vpack.c.b16 %v296, %v294
    %v345 = vpack.c.b16 %v297, %v295
    %v346 = vpack.c.b16 %v300, %v298
    %v347 = vpack.c.b16 %v301, %v299
    %v348 = vpack.c.b16 %v304, %v302
    %v349 = vpack.c.b16 %v305, %v303
    %v350 = vpack.c.b16 %v308, %v306
    %v351 = vpack.c.b16 %v309, %v307
    %v352 = vpack.c.b16 %v312, %v310
    %v353 = vpack.c.b16 %v313, %v311
    %v354 = vpack.c.b16 %v316, %v314
    %v355 = vpack.c.b16 %v317, %v315
    %v356 = vpack.c.b16 %v320, %v318
    %v357 = vpack.c.b16 %v321, %v319
    %v358 = vpack.c.b16 %v324, %v322
    %v359 = vpack.c.b16 %v325, %v323
    %v360 = vpack.c.b16 %v328, %v326
    %v361 = vpack.c.b16 %v329, %v327
    %394 = vmatprep.subr.bf16.mxu0 %v331
    %395 = vmatpush1.bf16.msra.mxu0 %v330
    %396 = vmatprep.subr.bf16.mxu0 %v333
    %397 = vmatpush1.bf16.msra.mxu0 %v332
    %398 = vmatprep.subr.bf16.mxu0 %v335
    %399 = vmatpush1.bf16.msra.mxu0 %v334
    %400 = vmatprep.subr.bf16.mxu0 %v337
    %401 = vmatpush1.bf16.msra.mxu0 %v336
    %402 = vmatprep.subr.bf16.mxu0 %v339
    %403 = vmatpush1.bf16.msra.mxu0 %v338
    %404 = vmatprep.subr.bf16.mxu0 %v341
    %405 = vmatpush1.bf16.msra.mxu0 %v340
    %406 = vmatprep.subr.bf16.mxu0 %v343
    %407 = vmatpush1.bf16.msra.mxu0 %v342
    %408 = vmatprep.subr.bf16.mxu0 %v345
    %409 = vmatpush1.bf16.msra.mxu0 %v344
    %410 = vmatprep.subr.bf16.mxu0 %v347
    %411 = vmatpush1.bf16.msra.mxu0 %v346
    %412 = vmatprep.subr.bf16.mxu0 %v349
    %413 = vmatpush1.bf16.msra.mxu0 %v348
    %414 = vmatprep.subr.bf16.mxu0 %v351
    %415 = vmatpush1.bf16.msra.mxu0 %v350
    %416 = vmatprep.subr.bf16.mxu0 %v353
    %417 = vmatpush1.bf16.msra.mxu0 %v352
    %418 = vmatprep.subr.bf16.mxu0 %v355
    %419 = vmatpush1.bf16.msra.mxu0 %v354
    %420 = vmatprep.subr.bf16.mxu0 %v357
    %421 = vmatpush1.bf16.msra.mxu0 %v356
    %422 = vmatprep.subr.bf16.mxu0 %v359
    %423 = vmatpush1.bf16.msra.mxu0 %v358
    %424 = vmatprep.subr.bf16.mxu0 %v361
    %425 = vmatpush1.bf16.msra.mxu0 %v360
    %426 = vmatprep.mubr.bf16.mxu0 %v189
    %427 = vmatmul.mubr.bf16.gmra.mrb[0].mxu0 %v188
    %v428 = vpop.f32.mrb[0].mxu0
    %v429 = vadd.f32 %v227, %v428
    %v430 = vpop.f32.mrb[0].mxu0
    %v431 = vadd.f32 %v231, %v430
    %v432 = vpop.f32.mrb[0].mxu0
    %v433 = vpop.f32.mrb[0].mxu0
    %434 = vdwg.mxu0
    %v435 = vmax.f32 %v429, 0.0
    %v436 = vmax.f32 %v431, 0.0
    %v437 = vpack.c.bf16 %v435, %v435
    %v438 = vpack.c.bf16 %v436, %v436
    %v439 = vld [vmem:[%s5] sm:$0xf]
    %v440 = vld [vmem:[%s5 + $0x4] sm:$0xf]
    %v441 = vld [vmem:[%s5 + $0x8] sm:$0xf]
    %v442 = vld [vmem:[%s5 + $0xc] sm:$0xf]
    %v443 = vld [vmem:[%s5 + $0x10] sm:$0xf]
    %v444 = vld [vmem:[%s5 + $0x14] sm:$0xf]
    %v445 = vld [vmem:[%s5 + $0x18] sm:$0xf]
    %v446 = vld [vmem:[%s5 + $0x1c] sm:$0xf]
    %v447 = vld [vmem:[%s5 + $0x20] sm:$0xf]
    %v448 = vld [vmem:[%s5 + $0x24] sm:$0xf]
    %v449 = vld [vmem:[%s5 + $0x28] sm:$0xf]
    %v450 = vld [vmem:[%s5 + $0x2c] sm:$0xf]
    %v451 = vld [vmem:[%s5 + $0x30] sm:$0xf]
    %v452 = vld [vmem:[%s5 + $0x34] sm:$0xf]
    %v453 = vld [vmem:[%s5 + $0x38] sm:$0xf]
    %v454 = vld [vmem:[%s5 + $0x3c] sm:$0xf]
    %v455 = vld [vmem:[%s5 + $0x40] sm:$0xf]
    %v456 = vld [vmem:[%s5 + $0x44] sm:$0xf]
    %v457 = vld [vmem:[%s5 + $0x48] sm:$0xf]
    %v458 = vld [vmem:[%s5 + $0x4c] sm:$0xf]
    %v459 = vld [vmem:[%s5 + $0x50] sm:$0xf]
    %v460 = vld [vmem:[%s5 + $0x54] sm:$0xf]
    %v461 = vld [vmem:[%s5 + $0x58] sm:$0xf]
    %v462 = vld [vmem:[%s5 + $0x5c] sm:$0xf]
    %v463 = vld [vmem:[%s5 + $0x60] sm:$0xf]
    %v464 = vld [vmem:[%s5 + $0x64] sm:$0xf]
    %v465 = vld [vmem:[%s5 + $0x68] sm:$0xf]
    %v466 = vld [vmem:[%s5 + $0x6c] sm:$0xf]
    %v467 = vld [vmem:[%s5 + $0x70] sm:$0xf]
    %v468 = vld [vmem:[%s5 + $0x74] sm:$0xf]
    %v469 = vld [vmem:[%s5 + $0x78] sm:$0xf]
    %v470 = vld [vmem:[%s5 + $0x7c] sm:$0xf]
    %v471 = vld [vmem:[%s6] sm:$0x1]
    %v473 = vlaneseq
    %v474 = vshrl.u32 %v473, 7
    %v475 = vsub.s32 0, %v474
    %v476 = vrot.slane %v471, %v475
    %v510 = vunpack.c.l.b16 %v439
    %v511 = vunpack.c.l.b16 %v440
    %v512 = vunpack.c.l.b16 %v441
    %v513 = vunpack.c.l.b16 %v442
    %v514 = vunpack.c.l.b16 %v443
    %v515 = vunpack.c.l.b16 %v444
    %v516 = vunpack.c.l.b16 %v445
    %v517 = vunpack.c.l.b16 %v446
    %v518 = vunpack.c.l.b16 %v447
    %v519 = vunpack.c.l.b16 %v448
    %v520 = vunpack.c.l.b16 %v449
    %v521 = vunpack.c.l.b16 %v450
    %v522 = vunpack.c.l.b16 %v451
    %v523 = vunpack.c.l.b16 %v452
    %v524 = vunpack.c.l.b16 %v453
    %v525 = vunpack.c.l.b16 %v454
    %v526 = vunpack.c.l.b16 %v455
    %v527 = vunpack.c.l.b16 %v456
    %v528 = vunpack.c.l.b16 %v457
    %v529 = vunpack.c.l.b16 %v458
    %v530 = vunpack.c.l.b16 %v459
    %v531 = vunpack.c.l.b16 %v460
    %v532 = vunpack.c.l.b16 %v461
    %v533 = vunpack.c.l.b16 %v462
    %v534 = vunpack.c.l.b16 %v463
    %v535 = vunpack.c.l.b16 %v464
    %v536 = vunpack.c.l.b16 %v465
    %v537 = vunpack.c.l.b16 %v466
    %v538 = vunpack.c.l.b16 %v467
    %v539 = vunpack.c.l.b16 %v468
    %v540 = vunpack.c.l.b16 %v469
    %v541 = vunpack.c.l.b16 %v470
    %v542 = vpack.c.b16 %v511, %v510
    %v543 = vpack.c.b16 %v513, %v512
    %v544 = vpack.c.b16 %v515, %v514
    %v545 = vpack.c.b16 %v517, %v516
    %v546 = vpack.c.b16 %v519, %v518
    %v547 = vpack.c.b16 %v521, %v520
    %v548 = vpack.c.b16 %v523, %v522
    %v549 = vpack.c.b16 %v525, %v524
    %v550 = vpack.c.b16 %v527, %v526
    %v551 = vpack.c.b16 %v529, %v528
    %v552 = vpack.c.b16 %v531, %v530
    %v553 = vpack.c.b16 %v533, %v532
    %v554 = vpack.c.b16 %v535, %v534
    %v555 = vpack.c.b16 %v537, %v536
    %v556 = vpack.c.b16 %v539, %v538
    %v557 = vpack.c.b16 %v541, %v540
    %574 = vmatprep.subr.bf16.mxu0 0
    %575 = vmatpush1.bf16.msra.mxu0 %v542
    %576 = vmatprep.subr.bf16.mxu0 0
    %577 = vmatpush1.bf16.msra.mxu0 %v543
    %578 = vmatprep.subr.bf16.mxu0 0
    %579 = vmatpush1.bf16.msra.mxu0 %v544
    %580 = vmatprep.subr.bf16.mxu0 0
    %581 = vmatpush1.bf16.msra.mxu0 %v545
    %582 = vmatprep.subr.bf16.mxu0 0
    %583 = vmatpush1.bf16.msra.mxu0 %v546
    %584 = vmatprep.subr.bf16.mxu0 0
    %585 = vmatpush1.bf16.msra.mxu0 %v547
    %586 = vmatprep.subr.bf16.mxu0 0
    %587 = vmatpush1.bf16.msra.mxu0 %v548
    %588 = vmatprep.subr.bf16.mxu0 0
    %589 = vmatpush1.bf16.msra.mxu0 %v549
    %590 = vmatprep.subr.bf16.mxu0 0
    %591 = vmatpush1.bf16.msra.mxu0 %v550
    %592 = vmatprep.subr.bf16.mxu0 0
    %593 = vmatpush1.bf16.msra.mxu0 %v551
    %594 = vmatprep.subr.bf16.mxu0 0
    %595 = vmatpush1.bf16.msra.mxu0 %v552
    %596 = vmatprep.subr.bf16.mxu0 0
    %597 = vmatpush1.bf16.msra.mxu0 %v553
    %598 = vmatprep.subr.bf16.mxu0 0
    %599 = vmatpush1.bf16.msra.mxu0 %v554
    %600 = vmatprep.subr.bf16.mxu0 0
    %601 = vmatpush1.bf16.msra.mxu0 %v555
    %602 = vmatprep.subr.bf16.mxu0 0
    %603 = vmatpush1.bf16.msra.mxu0 %v556
    %604 = vmatprep.subr.bf16.mxu0 0
    %605 = vmatpush1.bf16.msra.mxu0 %v557
    %606 = vmatprep.mubr.bf16.mxu0 %v438
    %607 = vmatmul.mubr.bf16.gmra.mrb[0].mxu0 %v437
    %v608 = vpop.f32.mrb[0].mxu0
    %v609 = vadd.f32 %v476, %v608
    %v610 = vpop.f32.mrb[0].mxu0
    %v611 = vpop.f32.mrb[0].mxu0
    %v612 = vpop.f32.mrb[0].mxu0
    %613 = vdwg.mxu0
    %v614 = vtanh.pop %v609
    %v615 = vadd.f32 %v614, 1.0
    %v616 = vmul.f32 %v615, 0.5
    %vm617 = vcmask 261120
    %618 = vst.msk [vmem:[#allocation5] sm:$0xff] %vm617, %v616
    // Predicated region
    $region34: #{tpu_custom_call.1} parent=1 // pred_check
      _
    $region35: #{tpu_custom_call.1} parent=1 // pred_check_branch
      %620 = sbr.rel (0) target = $region37
    $region36: #{tpu_custom_call.1} parent=1 // pred_region
      %s622 = ssub.s32 128, 128
      %623 = vsyncadd [#allocation4], %s622
      %s625 = sshll.u32 [#allocation5], 4
      %s626 = int_to_ptr.vmem [resolvable:$true] %s625
      %628 = dma.vmem_to_hbm [thread:$0]  %s626, 128, %s7, [#allocation4]
    $region37: #{tpu_custom_call.1} parent=1 // pred_fallthru
      _
    // Predicated region
    $region38: #{tpu_custom_call.1} parent=1 // pred_check
      _
    $region39: #{tpu_custom_call.1} parent=1 // pred_check_branch
      %630 = sbr.rel (0) target = $region41
    $region40: #{tpu_custom_call.1} parent=1 // pred_region
      %631 = dma.done [#allocation4], 128
    $region41: #{tpu_custom_call.1} parent=1 // pred_fallthru
      _
    %632 = vsyncpa [#allocation3], 1
    %633 = vsyncpa [#allocation4], 1

</llo_original>
